<compile_context>
chip_gen: v7x
topology: tpu7x:2x2x1
jax: 0.10.0
libtpu: 0.0.40
codegen_flags: <defaults>
</compile_context>

<pallas_src>
import math

import jax
import jax.numpy as jnp
from jax.experimental import pallas as pl
from jax.experimental.pallas import tpu as pltpu


# ----------------------------- Pallas kernel ------------------------------- #
def _intent_decoder_kernel(x_ref, intent_ref, wi_ref, bo_ref,
                           wq_ref, bq_ref, wo_ref, out_ref):
    B, T, H = x_ref.shape
    x = x_ref[...]                                   # (B, T, H) intent-decoder inputs
    xf = x.reshape(B * T, H)                         # leading-dim merge for the 2-D matmuls

    # query projection on all B*T rows at once; 1/sqrt(H) already folded into wq/bq at init
    q = (jnp.dot(xf, wq_ref[...], preferred_element_type=jnp.float32)
         + bq_ref[...]).reshape(B, T, H)

    # scaled dot-product attention over the intent-decoder inputs (batched einsum,
    # contraction over H -- no in-kernel weight transpose)
    s = jnp.einsum("btd,bsd->bts", q, x, preferred_element_type=jnp.float32)
    m = jnp.max(s, axis=-1, keepdims=True)
    p = jnp.exp(s - m)
    attn = p / jnp.sum(p, axis=-1, keepdims=True)    # exact softmax (not VALU/EUP-bound here)
    ctx = jnp.einsum("bts,bsd->btd", attn, x, preferred_element_type=jnp.float32)

    # intent conditioning computed in-kernel: (B,I) @ (I,H) + (1,H)
    iproj = (jnp.dot(intent_ref[...], wi_ref[...], preferred_element_type=jnp.float32)
             + bo_ref[...])                          # (B, H)

    # output projection + intent-conditioning bias + tanh
    out = jnp.dot(ctx.reshape(B * T, H), wo_ref[...],
                  preferred_element_type=jnp.float32).reshape(B, T, H)
    out = jnp.tanh(out + iproj[:, None, :])

    # lane-dense store: (B, T*H) last dim = 256 (multiple of 128) -> unmasked full-lane vst
    out_ref[...] = out.reshape(B, T * H).astype(out_ref.dtype)


# --------------------- one-time parameter preparation ----------------------- #
def prepare_decoder_params(params):
    """One-time weight transforms (kept OUT of the per-call path)."""
    H = params["Wq"].shape[0]
    scale = 1.0 / math.sqrt(H)
    return {
        "WqT_s":   (params["Wq"] * scale).T,   # (H, H), softmax 1/sqrt(H) folded in
        "bq_s":    params["bq"] * scale,       # (1, H)
        "WoT":     params["Wo"].T,             # (H, H)
        "Wi_decT": params["Wi_dec"].T,         # (I, H)
        "bo":      params["bo"],               # (1, H)
    }


# ------------------------------- wrapper ------------------------------------ #
def seq2intent_forward(inputIntent, intent_d, dec_params):
    """intent = dec_intent(inputIntent, intent_d); all decoder compute in one Pallas call."""
    B, T, H = inputIntent.shape
    I = intent_d.shape[-1]

    out_flat = pl.pallas_call(
        _intent_decoder_kernel,
        out_shape=jax.ShapeDtypeStruct((B, T * H), inputIntent.dtype),
        grid_spec=pltpu.PrefetchScalarGridSpec(
            num_scalar_prefetch=0,
            grid=(1,),                                             # whole batch in one step
            in_specs=[
                pl.BlockSpec((B, T, H), lambda i: (0, 0, 0)),      # inputIntent
                pl.BlockSpec((B, I), lambda i: (0, 0)),            # intent_d
                pl.BlockSpec((I, H), lambda i: (0, 0)),            # Wi_dec^T
                pl.BlockSpec((1, H), lambda i: (0, 0)),            # bo
                pl.BlockSpec((H, H), lambda i: (0, 0)),            # Wq^T (scale folded)
                pl.BlockSpec((1, H), lambda i: (0, 0)),            # bq   (scale folded)
                pl.BlockSpec((H, H), lambda i: (0, 0)),            # Wo^T
            ],
            out_specs=pl.BlockSpec((B, T * H), lambda i: (0, 0)),  # lane-dense (B, 256)
        ),
        compiler_params=pltpu.CompilerParams(dimension_semantics=("arbitrary",)),
    )(inputIntent, intent_d, dec_params["Wi_decT"], dec_params["bo"],
      dec_params["WqT_s"], dec_params["bq_s"], dec_params["WoT"])

    return out_flat.reshape(B, T, H)                               # free bitcast in wrapper


# --------------------------- pure-JAX reference ----------------------------- #
def _reference(inputIntent, intent_d, p):
    h = inputIntent.shape[-1]
    q = inputIntent @ p["Wq"].T + p["bq"]
    scores = jnp.einsum("btd,bsd->bts", q, inputIntent) / math.sqrt(h)
    attn = jax.nn.softmax(scores, axis=-1)
    ctx = jnp.einsum("bts,bsd->btd", attn, inputIntent)
    iproj = intent_d @ p["Wi_dec"].T
    return jnp.tanh(ctx @ p["Wo"].T + p["bo"] + iproj[:, None, :])


# ------------------------------- parameters --------------------------------- #
def init_params(key, hidden_size, intent_hid_size):
    ks = jax.random.split(key, 7)
    scale = 1.0 / math.sqrt(hidden_size)
    return {
        # representative dec_intent / attn_intent parameters
        "Wq": jax.random.normal(ks[0], (hidden_size, hidden_size), jnp.float32) * scale,
        "bq": jax.random.normal(ks[1], (1, hidden_size), jnp.float32) * scale,
        "Wo": jax.random.normal(ks[2], (hidden_size, hidden_size), jnp.float32) * scale,
        "bo": jax.random.normal(ks[3], (1, hidden_size), jnp.float32) * scale,
        "Wi_dec": jax.random.normal(ks[4], (hidden_size, intent_hid_size), jnp.float32) * scale,
        # Seq2Intent's own `fn` Linear (present in __init__, unused in forward -- parity only)
        "fn_W": jax.random.normal(ks[5], (intent_hid_size, hidden_size), jnp.float32) * scale,
        "fn_b": jax.random.normal(ks[6], (1, intent_hid_size), jnp.float32) * scale,
    }


# ---------------------------------- main ------------------------------------ #
if __name__ == "__main__":
    # TODO(synk): `dec_intent` / `attn_intent` are externally injected modules in the
    # original code; a representative attention intent decoder is used here.
    B, T, H, I = 2, 8, 32, 16   # batch, seq, EncoderHidSize, IntentHidSize

    key = jax.random.PRNGKey(0)
    k_in, k_it, k_par = jax.random.split(key, 3)

    inputIntent = jax.random.normal(k_in, (B, T, H), jnp.float32)
    intent_d = jax.random.normal(k_it, (B, I), jnp.float32)
    params = init_params(k_par, H, I)
    dec_params = prepare_decoder_params(params)      # one-time, outside the call path

    intent = seq2intent_forward(inputIntent, intent_d, dec_params)
    intent = jax.block_until_ready(intent)

    ref = _reference(inputIntent, intent_d, params)
    assert intent.shape == (B, T, H) and intent.dtype == jnp.float32
    assert jnp.allclose(intent, ref, atol=1e-4, rtol=1e-4), "Pallas kernel mismatch vs reference"

    print("KERNEL_OK")
</pallas_src>

<mosaic_0001>
module attributes {stable_mosaic.version = 11 : i64} {
  func.func @_intent_decoder_kernel(%arg0: i32, %arg1: memref<2x8x32xf32, #tpu.memory_space<vmem>>, %arg2: memref<2x16xf32, #tpu.memory_space<vmem>>, %arg3: memref<16x32xf32, #tpu.memory_space<vmem>>, %arg4: memref<1x32xf32, #tpu.memory_space<vmem>>, %arg5: memref<32x32xf32, #tpu.memory_space<vmem>>, %arg6: memref<1x32xf32, #tpu.memory_space<vmem>>, %arg7: memref<32x32xf32, #tpu.memory_space<vmem>>, %arg8: memref<2x256xf32, #tpu.memory_space<vmem>>) attributes {dimension_semantics = [#tpu.dimension_semantics<arbitrary>], iteration_bounds = array<i64: 1>, scalar_prefetch = 0 : i64, scratch_operands = 0 : i64, tpu.core_type = #tpu.core_type<tc>, window_params = [{pipeline_mode = #tpu.pipeline_mode<synchronous>, transform_indices = @transform_0, window_bounds = array<i64: 2, 8, 32>}, {pipeline_mode = #tpu.pipeline_mode<synchronous>, transform_indices = @transform_1, window_bounds = array<i64: 2, 16>}, {pipeline_mode = #tpu.pipeline_mode<synchronous>, transform_indices = @transform_2, window_bounds = array<i64: 16, 32>}, {pipeline_mode = #tpu.pipeline_mode<synchronous>, transform_indices = @transform_3, window_bounds = array<i64: 1, 32>}, {pipeline_mode = #tpu.pipeline_mode<synchronous>, transform_indices = @transform_4, window_bounds = array<i64: 32, 32>}, {pipeline_mode = #tpu.pipeline_mode<synchronous>, transform_indices = @transform_5, window_bounds = array<i64: 1, 32>}, {pipeline_mode = #tpu.pipeline_mode<synchronous>, transform_indices = @transform_6, window_bounds = array<i64: 32, 32>}, {pipeline_mode = #tpu.pipeline_mode<synchronous>, transform_indices = @transform_7, window_bounds = array<i64: 2, 256>}]} {
    %c0 = arith.constant 0 : index
    %c0_0 = arith.constant 0 : index
    %c0_1 = arith.constant 0 : index
    %0 = vector.load %arg1[%c0, %c0_0, %c0_1] : memref<2x8x32xf32, #tpu.memory_space<vmem>>, vector<2x8x32xf32>
    %1 = vector.shape_cast %0 : vector<2x8x32xf32> to vector<16x32xf32>
    %c0_2 = arith.constant 0 : index
    %c0_3 = arith.constant 0 : index
    %2 = vector.load %arg5[%c0_2, %c0_3] : memref<32x32xf32, #tpu.memory_space<vmem>>, vector<32x32xf32>
    %cst = arith.constant dense<0.000000e+00> : vector<16x32xf32>
    %3 = tpu.matmul %1, %2, %cst {dimension_numbers = #tpu.dot_dimension_numbers<[1], [0], [0], [1], [0, 0, 1, 1], [], []>} : vector<16x32xf32>, vector<32x32xf32>, vector<16x32xf32> -> vector<16x32xf32>
    %c0_4 = arith.constant 0 : index
    %c0_5 = arith.constant 0 : index
    %4 = vector.load %arg6[%c0_4, %c0_5] : memref<1x32xf32, #tpu.memory_space<vmem>>, vector<1x32xf32>
    %5 = vector.broadcast %4 : vector<1x32xf32> to vector<16x32xf32>
    %6 = arith.addf %3, %5 : vector<16x32xf32>
    %7 = vector.shape_cast %6 : vector<16x32xf32> to vector<2x8x32xf32>
    "tpu.trace_start"() <{level = 10 : i32, message = "btd,bsd->bts"}> : () -> ()
    %cst_6 = arith.constant dense<0.000000e+00> : vector<2x8x8xf32>
    %8 = tpu.matmul %7, %0, %cst_6 {dimension_numbers = #tpu.dot_dimension_numbers<[2], [2], [1], [1], [0, 0, 0, 1, 1, 1], [0], [0]>} : vector<2x8x32xf32>, vector<2x8x32xf32>, vector<2x8x8xf32> -> vector<2x8x8xf32>
    "tpu.trace_stop"() : () -> ()
    %cst_7 = arith.constant dense<0xFF800000> : vector<2x8xf32>
    %9 = vector.multi_reduction <maximumf>, %8, %cst_7 [2] : vector<2x8x8xf32> to vector<2x8xf32>
    %10 = vector.shape_cast %9 : vector<2x8xf32> to vector<2x8x1xf32>
    %11 = vector.broadcast %10 : vector<2x8x1xf32> to vector<2x8x8xf32>
    %12 = arith.subf %8, %11 : vector<2x8x8xf32>
    %13 = math.exp %12 : vector<2x8x8xf32>
    %cst_8 = arith.constant dense<0.000000e+00> : vector<2x8xf32>
    %14 = vector.multi_reduction <add>, %13, %cst_8 [2] : vector<2x8x8xf32> to vector<2x8xf32>
    %15 = vector.shape_cast %14 : vector<2x8xf32> to vector<2x8x1xf32>
    %16 = vector.broadcast %15 : vector<2x8x1xf32> to vector<2x8x8xf32>
    %17 = arith.divf %13, %16 : vector<2x8x8xf32>
    "tpu.trace_start"() <{level = 10 : i32, message = "bts,bsd->btd"}> : () -> ()
    %cst_9 = arith.constant dense<0.000000e+00> : vector<2x8x32xf32>
    %18 = tpu.matmul %17, %0, %cst_9 {dimension_numbers = #tpu.dot_dimension_numbers<[2], [1], [1], [2], [0, 0, 0, 1, 1, 2], [0], [0]>} : vector<2x8x8xf32>, vector<2x8x32xf32>, vector<2x8x32xf32> -> vector<2x8x32xf32>
    "tpu.trace_stop"() : () -> ()
    %c0_10 = arith.constant 0 : index
    %c0_11 = arith.constant 0 : index
    %19 = vector.load %arg2[%c0_10, %c0_11] : memref<2x16xf32, #tpu.memory_space<vmem>>, vector<2x16xf32>
    %c0_12 = arith.constant 0 : index
    %c0_13 = arith.constant 0 : index
    %20 = vector.load %arg3[%c0_12, %c0_13] : memref<16x32xf32, #tpu.memory_space<vmem>>, vector<16x32xf32>
    %cst_14 = arith.constant dense<0.000000e+00> : vector<2x32xf32>
    %21 = tpu.matmul %19, %20, %cst_14 {dimension_numbers = #tpu.dot_dimension_numbers<[1], [0], [0], [1], [0, 0, 1, 1], [], []>} : vector<2x16xf32>, vector<16x32xf32>, vector<2x32xf32> -> vector<2x32xf32>
    %c0_15 = arith.constant 0 : index
    %c0_16 = arith.constant 0 : index
    %22 = vector.load %arg4[%c0_15, %c0_16] : memref<1x32xf32, #tpu.memory_space<vmem>>, vector<1x32xf32>
    %23 = vector.broadcast %22 : vector<1x32xf32> to vector<2x32xf32>
    %24 = arith.addf %21, %23 : vector<2x32xf32>
    %25 = vector.shape_cast %18 : vector<2x8x32xf32> to vector<16x32xf32>
    %c0_17 = arith.constant 0 : index
    %c0_18 = arith.constant 0 : index
    %26 = vector.load %arg7[%c0_17, %c0_18] : memref<32x32xf32, #tpu.memory_space<vmem>>, vector<32x32xf32>
    %cst_19 = arith.constant dense<0.000000e+00> : vector<16x32xf32>
    %27 = tpu.matmul %25, %26, %cst_19 {dimension_numbers = #tpu.dot_dimension_numbers<[1], [0], [0], [1], [0, 0, 1, 1], [], []>} : vector<16x32xf32>, vector<32x32xf32>, vector<16x32xf32> -> vector<16x32xf32>
    %28 = vector.shape_cast %27 : vector<16x32xf32> to vector<2x8x32xf32>
    %29 = vector.shape_cast %24 : vector<2x32xf32> to vector<2x1x32xf32>
    %30 = vector.broadcast %29 : vector<2x1x32xf32> to vector<2x8x32xf32>
    %31 = arith.addf %28, %30 : vector<2x8x32xf32>
    %32 = math.tanh %31 : vector<2x8x32xf32>
    %33 = vector.shape_cast %32 : vector<2x8x32xf32> to vector<2x256xf32>
    %c0_20 = arith.constant 0 : index
    %c0_21 = arith.constant 0 : index
    %34 = vector.load %arg8[%c0_20, %c0_21] : memref<2x256xf32, #tpu.memory_space<vmem>>, vector<2x256xf32>
    tpu.vector_store %arg8[%c0_20, %c0_21], %33 {strides = array<i32>} : memref<2x256xf32, #tpu.memory_space<vmem>>, vector<2x256xf32>,
    return
  }
  func.func @transform_0(%arg0: i32) -> (i32, i32, i32) {
    %c0_i32 = arith.constant 0 : i32
    %c0_i32_0 = arith.constant 0 : i32
    %c0_i32_1 = arith.constant 0 : i32
    %c0_i32_2 = arith.constant 0 : i32
    return %c0_i32, %c0_i32_0, %c0_i32_1 : i32, i32, i32
  }
  func.func @transform_1(%arg0: i32) -> (i32, i32) {
    %c0_i32 = arith.constant 0 : i32
    %c0_i32_0 = arith.constant 0 : i32
    %c0_i32_1 = arith.constant 0 : i32
    return %c0_i32, %c0_i32_0 : i32, i32
  }
  func.func @transform_2(%arg0: i32) -> (i32, i32) {
    %c0_i32 = arith.constant 0 : i32
    %c0_i32_0 = arith.constant 0 : i32
    %c0_i32_1 = arith.constant 0 : i32
    return %c0_i32, %c0_i32_0 : i32, i32
  }
  func.func @transform_3(%arg0: i32) -> (i32, i32) {
    %c0_i32 = arith.constant 0 : i32
    %c0_i32_0 = arith.constant 0 : i32
    %c0_i32_1 = arith.constant 0 : i32
    return %c0_i32, %c0_i32_0 : i32, i32
  }
  func.func @transform_4(%arg0: i32) -> (i32, i32) {
    %c0_i32 = arith.constant 0 : i32
    %c0_i32_0 = arith.constant 0 : i32
    %c0_i32_1 = arith.constant 0 : i32
    return %c0_i32, %c0_i32_0 : i32, i32
  }
  func.func @transform_5(%arg0: i32) -> (i32, i32) {
    %c0_i32 = arith.constant 0 : i32
    %c0_i32_0 = arith.constant 0 : i32
    %c0_i32_1 = arith.constant 0 : i32
    return %c0_i32, %c0_i32_0 : i32, i32
  }
  func.func @transform_6(%arg0: i32) -> (i32, i32) {
    %c0_i32 = arith.constant 0 : i32
    %c0_i32_0 = arith.constant 0 : i32
    %c0_i32_1 = arith.constant 0 : i32
    return %c0_i32, %c0_i32_0 : i32, i32
  }
  func.func @transform_7(%arg0: i32) -> (i32, i32) {
    %c0_i32 = arith.constant 0 : i32
    %c0_i32_0 = arith.constant 0 : i32
    %c0_i32_1 = arith.constant 0 : i32
    return %c0_i32, %c0_i32_0 : i32, i32
  }
}

</mosaic_0001>

<llo_original>
// kernel: tpu_custom_call.1
$region0: #{tpu_custom_call.1}
  #allocation0 [shape = 'u32[]', space=smem, size = 0x4, offset = 0x4, fixed_abs, tag = 'smem constant byte address 0x4 - core index']
  #allocation1 [shape = 'u32[144,128]{1,0:T(1,128)}', space=vmem, size = 0x12000, scoped, tag = 'internal scratch']
  %s0 = inlined_call_operand.hbm [shape: f32[2,8,32], index: 0, kind: input, shape index: {}]
  %s1 = inlined_call_operand.vmem [shape: f32[2,16], index: 1, kind: input, shape index: {}]
  %s2 = inlined_call_operand.hbm [shape: f32[16,32], index: 2, kind: input, shape index: {}]
  %s3 = inlined_call_operand.vmem [shape: f32[1,32], index: 3, kind: input, shape index: {}]
  %s4 = inlined_call_operand.hbm [shape: f32[32,32], index: 4, kind: input, shape index: {}]
  %s5 = inlined_call_operand.vmem [shape: f32[1,32], index: 5, kind: input, shape index: {}]
  %s6 = inlined_call_operand.hbm [shape: f32[32,32], index: 6, kind: input, shape index: {}]
  %s7 = inlined_call_operand.hbm [shape: f32[2,256], index: 7, kind: output, shape index: {}]
  %s8 = sld [smem:[#allocation0]]
  $region54: #{tpu_custom_call.1} parent=0
    _
  %s10 = ssub.s32 1, %s8
  %s11 = scalar_select 0, %s10, %s8
  $region1: #{tpu_custom_call.1} parent=0
    #allocation2 [shape = 'u8[8192]{0}', space=vmem, size = 0x2000, scoped, tag = 'input window, operand 0, single buffered']
    #allocation3 [shape = 's32[1]{0}', space=sflag, size = 0x4, scoped, tag = 'scoped memory for tpu_custom_call.1']
    #allocation4 [shape = 's32[1]{0}', space=sflag, size = 0x4, scoped, tag = 'scoped memory for tpu_custom_call.1']
    #allocation5 [shape = 'u8[8192]{0}', space=vmem, size = 0x2000, scoped, tag = 'input window, operand 2, single buffered']
    #allocation6 [shape = 's32[1]{0}', space=sflag, size = 0x4, scoped, tag = 'scoped memory for tpu_custom_call.1']
    #allocation7 [shape = 'u8[16384]{0}', space=vmem, size = 0x4000, scoped, tag = 'input window, operand 4, single buffered']
    #allocation8 [shape = 'u8[16384]{0}', space=vmem, size = 0x4000, scoped, tag = 'input window, operand 6, single buffered']
    #allocation9 [shape = 's32[1]{0}', space=sflag, size = 0x4, scoped, tag = 'scoped memory for tpu_custom_call.1']
    #allocation10 [shape = 'u8[2048]{0}', space=vmem, size = 0x800, scoped, tag = 'output window, operand 0, single buffered']
    %12 = vsyncpa [#allocation3], 0
    %13 = vsyncpa [#allocation6], 0
    %14 = vsyncpa [#allocation9], 0
    %15 = vsyncpa [#allocation4], 0
    // Predicated region
    $region2: #{tpu_custom_call.1} parent=1 // pred_check
      _
    $region3: #{tpu_custom_call.1} parent=1 // pred_check_branch
      %17 = sbr.rel (0) target = $region5
    $region4: #{tpu_custom_call.1} parent=1 // pred_region
      %s19 = ssub.s32 256, 256
      %20 = vsyncadd [#allocation3], %s19
      %s21 = sshll.u32 [#allocation2], 4
      %s22 = int_to_ptr.vmem [resolvable:$true] %s21
      %27 = dma.hbm_to_vmem [thread:$0]  %s0, 256, %s22, [#allocation3], 128, 128, 8
    $region5: #{tpu_custom_call.1} parent=1 // pred_fallthru
      _
    // Predicated region
    $region6: #{tpu_custom_call.1} parent=1 // pred_check
      _
    $region7: #{tpu_custom_call.1} parent=1 // pred_check_branch
      %29 = sbr.rel (0) target = $region9
    $region8: #{tpu_custom_call.1} parent=1 // pred_region
      _
    $region9: #{tpu_custom_call.1} parent=1 // pred_fallthru
      _
    // Predicated region
    $region10: #{tpu_custom_call.1} parent=1 // pred_check
      _
    $region11: #{tpu_custom_call.1} parent=1 // pred_check_branch
      %31 = sbr.rel (0) target = $region13
    $region12: #{tpu_custom_call.1} parent=1 // pred_region
      %s33 = ssub.s32 256, 256
      %34 = vsyncadd [#allocation6], %s33
      %s35 = sshll.u32 [#allocation5], 4
      %s36 = int_to_ptr.vmem [resolvable:$true] %s35
      %41 = dma.hbm_to_vmem [thread:$0]  %s2, 256, %s36, [#allocation6], 128, 128, 8
    $region13: #{tpu_custom_call.1} parent=1 // pred_fallthru
      _
    // Predicated region
    $region14: #{tpu_custom_call.1} parent=1 // pred_check
      _
    $region15: #{tpu_custom_call.1} parent=1 // pred_check_branch
      %43 = sbr.rel (0) target = $region17
    $region16: #{tpu_custom_call.1} parent=1 // pred_region
      _
    $region17: #{tpu_custom_call.1} parent=1 // pred_fallthru
      _
    // Predicated region
    $region18: #{tpu_custom_call.1} parent=1 // pred_check
      _
    $region19: #{tpu_custom_call.1} parent=1 // pred_check_branch
      %45 = sbr.rel (0) target = $region21
    $region20: #{tpu_custom_call.1} parent=1 // pred_region
      %s47 = ssub.s32 512, 512
      %48 = vsyncadd [#allocation6], %s47
      %s49 = sshll.u32 [#allocation7], 4
      %s50 = int_to_ptr.vmem [resolvable:$true] %s49
      %55 = dma.hbm_to_vmem [thread:$0]  %s4, 512, %s50, [#allocation6], 128, 128, 8
    $region21: #{tpu_custom_call.1} parent=1 // pred_fallthru
      _
    // Predicated region
    $region22: #{tpu_custom_call.1} parent=1 // pred_check
      _
    $region23: #{tpu_custom_call.1} parent=1 // pred_check_branch
      %57 = sbr.rel (0) target = $region25
    $region24: #{tpu_custom_call.1} parent=1 // pred_region
      _
    $region25: #{tpu_custom_call.1} parent=1 // pred_fallthru
      _
    // Predicated region
    $region26: #{tpu_custom_call.1} parent=1 // pred_check
      _
    $region27: #{tpu_custom_call.1} parent=1 // pred_check_branch
      %59 = sbr.rel (0) target = $region29
    $region28: #{tpu_custom_call.1} parent=1 // pred_region
      %s61 = ssub.s32 512, 512
      %62 = vsyncadd [#allocation9], %s61
      %s63 = sshll.u32 [#allocation8], 4
      %s64 = int_to_ptr.vmem [resolvable:$true] %s63
      %69 = dma.hbm_to_vmem [thread:$0]  %s6, 512, %s64, [#allocation9], 128, 128, 8
    $region29: #{tpu_custom_call.1} parent=1 // pred_fallthru
      _
    // Predicated region
    $region30: #{tpu_custom_call.1} parent=1 // pred_check
      _
    $region31: #{tpu_custom_call.1} parent=1 // pred_check_branch
      %71 = sbr.rel (0) target = $region33
    $region32: #{tpu_custom_call.1} parent=1 // pred_region
      %72 = dma.done [#allocation3], 256
    $region33: #{tpu_custom_call.1} parent=1 // pred_fallthru
      _
    // Predicated region
    $region34: #{tpu_custom_call.1} parent=1 // pred_check
      _
    $region35: #{tpu_custom_call.1} parent=1 // pred_check_branch
      %74 = sbr.rel (0) target = $region37
    $region36: #{tpu_custom_call.1} parent=1 // pred_region
      %75 = dma.done [#allocation6], 256
    $region37: #{tpu_custom_call.1} parent=1 // pred_fallthru
      _
    // Predicated region
    $region38: #{tpu_custom_call.1} parent=1 // pred_check
      _
    $region39: #{tpu_custom_call.1} parent=1 // pred_check_branch
      %77 = sbr.rel (0) target = $region41
    $region40: #{tpu_custom_call.1} parent=1 // pred_region
      %78 = dma.done [#allocation6], 512
    $region41: #{tpu_custom_call.1} parent=1 // pred_fallthru
      _
    // Predicated region
    $region42: #{tpu_custom_call.1} parent=1 // pred_check
      _
    $region43: #{tpu_custom_call.1} parent=1 // pred_check_branch
      %80 = sbr.rel (0) target = $region45
    $region44: #{tpu_custom_call.1} parent=1 // pred_region
      %81 = dma.done [#allocation9], 512
    $region45: #{tpu_custom_call.1} parent=1 // pred_fallthru
      _
    %v82 = vld [vmem:[#allocation2] sm:$0xff]
    %v83 = vld [vmem:[#allocation2 + $0x8] sm:$0xff]
    %v84 = vld [vmem:[#allocation7] sm:$0xff]
    %v85 = vld [vmem:[#allocation7 + $0x8] sm:$0xff]
    %v86 = vld [vmem:[#allocation7 + $0x10] sm:$0xff]
    %v87 = vld [vmem:[#allocation7 + $0x18] sm:$0xff]
    %v88 = vld [vmem:[%s5] sm:$0x1]
    %v90 = vlaneseq
    %v91 = vshrl.u32 %v90, 7
    %v92 = vsub.s32 0, %v91
    %v93 = vrot.slane %v88, %v92
    %vm95 = vcmask 261120
    %v97 = vsel %vm95, %v82, 0
    %v100 = vsel %vm95, %v83, 0
    %102 = vmatprep.subr.mxu0 0.0
    %103 = vmatpush1.msra.mxu0 %v84
    %104 = vmatprep.subr.mxu0 0.0
    %105 = vmatpush1.msra.mxu0 %v85
    %106 = vmatprep.subr.mxu0 0.0
    %107 = vmatpush1.msra.mxu0 %v86
    %108 = vmatprep.subr.mxu0 0.0
    %109 = vmatpush1.msra.mxu0 %v87
    %110 = vmatprep.subr.mxu0 0.0
    %111 = vmatpush1.msra.mxu0 0.0
    %112 = vmatprep.subr.mxu0 0.0
    %113 = vmatpush1.msra.mxu0 0.0
    %114 = vmatprep.subr.mxu0 0.0
    %115 = vmatpush1.msra.mxu0 0.0
    %116 = vmatprep.subr.mxu0 0.0
    %117 = vmatpush1.msra.mxu0 0.0
    %118 = vmatprep.subr.mxu0 0.0
    %119 = vmatpush1.msra.mxu0 0.0
    %120 = vmatprep.subr.mxu0 0.0
    %121 = vmatpush1.msra.mxu0 0.0
    %122 = vmatprep.subr.mxu0 0.0
    %123 = vmatpush1.msra.mxu0 0.0
    %124 = vmatprep.subr.mxu0 0.0
    %125 = vmatpush1.msra.mxu0 0.0
    %126 = vmatprep.subr.mxu0 0.0
    %127 = vmatpush1.msra.mxu0 0.0
    %128 = vmatprep.subr.mxu0 0.0
    %129 = vmatpush1.msra.mxu0 0.0
    %130 = vmatprep.subr.mxu0 0.0
    %131 = vmatpush1.msra.mxu0 0.0
    %132 = vmatprep.subr.mxu0 0.0
    %133 = vmatpush1.msra.mxu0 0.0
    %134 = vmatprep.subr.mxu0 0.0
    %135 = vmatpush1.msra.mxu0 0.0
    %136 = vmatprep.subr.mxu0 0.0
    %137 = vmatpush1.msra.mxu0 0.0
    %138 = vmatprep.subr.mxu0 0.0
    %139 = vmatpush1.msra.mxu0 0.0
    %140 = vmatprep.subr.mxu0 0.0
    %141 = vmatpush1.msra.mxu0 0.0
    %142 = vmatprep.subr.mxu0 0.0
    %143 = vmatpush1.msra.mxu0 0.0
    %144 = vmatprep.subr.mxu0 0.0
    %145 = vmatpush1.msra.mxu0 0.0
    %146 = vmatprep.subr.mxu0 0.0
    %147 = vmatpush1.msra.mxu0 0.0
    %148 = vmatprep.subr.mxu0 0.0
    %149 = vmatpush1.msra.mxu0 0.0
    %150 = vmatprep.subr.mxu0 0.0
    %151 = vmatpush1.msra.mxu0 0.0
    %152 = vmatprep.subr.mxu0 0.0
    %153 = vmatpush1.msra.mxu0 0.0
    %154 = vmatprep.subr.mxu0 0.0
    %155 = vmatpush1.msra.mxu0 0.0
    %156 = vmatprep.subr.mxu0 0.0
    %157 = vmatpush1.msra.mxu0 0.0
    %158 = vmatprep.subr.mxu0 0.0
    %159 = vmatpush1.msra.mxu0 0.0
    %160 = vmatprep.subr.mxu0 0.0
    %161 = vmatpush1.msra.mxu0 0.0
    %162 = vmatprep.subr.mxu0 0.0
    %163 = vmatpush1.msra.mxu0 0.0
    %164 = vmatprep.subr.mxu0 0.0
    %165 = vmatpush1.msra.mxu0 0.0
    %166 = vmatprep.mubr.f32.mxu0 0.0
    %167 = vmatmul.mubr.f32.gmra.mrb[0].mxu0 %v97
    %v168 = vpop.f32.mrb[0].mxu0
    %v169 = vadd.f32 %v93, %v168
    %v170 = vpop.f32.mrb[0].mxu0
    %171 = vmatprep.mubr.f32.mxu0 0.0
    %172 = vmatmul.mubr.f32.gmra.mrb[0].mxu0 %v100
    %v173 = vpop.f32.mrb[0].mxu0
    %v174 = vadd.f32 %v93, %v173
    %v175 = vpop.f32.mrb[0].mxu0
    %176 = vdwg.mxu0
    %v178 = vsel %vm95, %v169, 0
    %180 = vmatprep.subr.mxu0 0.0
    %181 = vmatpush1.xpose.msra.mxu0 %v97
    %182 = vmatprep.subr.mxu0 0.0
    %183 = vmatpush1.xpose.msra.mxu0 0.0
    %184 = vmatprep.subr.mxu0 0.0
    %185 = vmatpush1.xpose.msra.mxu0 0.0
    %186 = vmatprep.subr.mxu0 0.0
    %187 = vmatpush1.xpose.msra.mxu0 0.0
    %188 = vmatprep.subr.mxu0 0.0
    %189 = vmatpush1.xpose.msra.mxu0 0.0
    %190 = vmatprep.subr.mxu0 0.0
    %191 = vmatpush1.xpose.msra.mxu0 0.0
    %192 = vmatprep.subr.mxu0 0.0
    %193 = vmatpush1.xpose.msra.mxu0 0.0
    %194 = vmatprep.subr.mxu0 0.0
    %195 = vmatpush1.xpose.msra.mxu0 0.0
    %196 = vmatprep.subr.mxu0 0.0
    %197 = vmatpush1.xpose.msra.mxu0 0.0
    %198 = vmatprep.subr.mxu0 0.0
    %199 = vmatpush1.xpose.msra.mxu0 0.0
    %200 = vmatprep.subr.mxu0 0.0
    %201 = vmatpush1.xpose.msra.mxu0 0.0
    %202 = vmatprep.subr.mxu0 0.0
    %203 = vmatpush1.xpose.msra.mxu0 0.0
    %204 = vmatprep.subr.mxu0 0.0
    %205 = vmatpush1.xpose.msra.mxu0 0.0
    %206 = vmatprep.subr.mxu0 0.0
    %207 = vmatpush1.xpose.msra.mxu0 0.0
    %208 = vmatprep.subr.mxu0 0.0
    %209 = vmatpush1.xpose.msra.mxu0 0.0
    %210 = vmatprep.subr.mxu0 0.0
    %211 = vmatpush1.xpose.msra.mxu0 0.0
    %212 = vmatprep.subr.mxu0 0.0
    %213 = vmatpush1.xpose.msra.mxu0 0.0
    %214 = vmatprep.subr.mxu0 0.0
    %215 = vmatpush1.xpose.msra.mxu0 0.0
    %216 = vmatprep.subr.mxu0 0.0
    %217 = vmatpush1.xpose.msra.mxu0 0.0
    %218 = vmatprep.subr.mxu0 0.0
    %219 = vmatpush1.xpose.msra.mxu0 0.0
    %220 = vmatprep.subr.mxu0 0.0
    %221 = vmatpush1.xpose.msra.mxu0 0.0
    %222 = vmatprep.subr.mxu0 0.0
    %223 = vmatpush1.xpose.msra.mxu0 0.0
    %224 = vmatprep.subr.mxu0 0.0
    %225 = vmatpush1.xpose.msra.mxu0 0.0
    %226 = vmatprep.subr.mxu0 0.0
    %227 = vmatpush1.xpose.msra.mxu0 0.0
    %228 = vmatprep.subr.mxu0 0.0
    %229 = vmatpush1.xpose.msra.mxu0 0.0
    %230 = vmatprep.subr.mxu0 0.0
    %231 = vmatpush1.xpose.msra.mxu0 0.0
    %232 = vmatprep.subr.mxu0 0.0
    %233 = vmatpush1.xpose.msra.mxu0 0.0
    %234 = vmatprep.subr.mxu0 0.0
    %235 = vmatpush1.xpose.msra.mxu0 0.0
    %236 = vmatprep.subr.mxu0 0.0
    %237 = vmatpush1.xpose.msra.mxu0 0.0
    %238 = vmatprep.subr.mxu0 0.0
    %239 = vmatpush1.xpose.msra.mxu0 0.0
    %240 = vmatprep.subr.mxu0 0.0
    %241 = vmatpush1.xpose.msra.mxu0 0.0
    %242 = vmatprep.subr.mxu0 0.0
    %243 = vmatpush1.xpose.msra.mxu0 0.0
    %244 = vmatprep.mubr.f32.mxu0 0.0
    %245 = vmatmul.mubr.f32.gmra.mrb[0].mxu0 %v178
    %v246 = vpop.f32.mrb[0].mxu0
    %v247 = vadd.f32 0.0, %v246
    %v248 = vpop.f32.mrb[0].mxu0
    %249 = vdwg.mxu0
    %v251 = vsel %vm95, %v174, 0
    %253 = vmatprep.subr.mxu0 0.0
    %254 = vmatpush1.xpose.msra.mxu0 %v100
    %255 = vmatprep.subr.mxu0 0.0
    %256 = vmatpush1.xpose.msra.mxu0 0.0
    %257 = vmatprep.subr.mxu0 0.0
    %258 = vmatpush1.xpose.msra.mxu0 0.0
    %259 = vmatprep.subr.mxu0 0.0
    %260 = vmatpush1.xpose.msra.mxu0 0.0
    %261 = vmatprep.subr.mxu0 0.0
    %262 = vmatpush1.xpose.msra.mxu0 0.0
    %263 = vmatprep.subr.mxu0 0.0
    %264 = vmatpush1.xpose.msra.mxu0 0.0
    %265 = vmatprep.subr.mxu0 0.0
    %266 = vmatpush1.xpose.msra.mxu0 0.0
    %267 = vmatprep.subr.mxu0 0.0
    %268 = vmatpush1.xpose.msra.mxu0 0.0
    %269 = vmatprep.subr.mxu0 0.0
    %270 = vmatpush1.xpose.msra.mxu0 0.0
    %271 = vmatprep.subr.mxu0 0.0
    %272 = vmatpush1.xpose.msra.mxu0 0.0
    %273 = vmatprep.subr.mxu0 0.0
    %274 = vmatpush1.xpose.msra.mxu0 0.0
    %275 = vmatprep.subr.mxu0 0.0
    %276 = vmatpush1.xpose.msra.mxu0 0.0
    %277 = vmatprep.subr.mxu0 0.0
    %278 = vmatpush1.xpose.msra.mxu0 0.0
    %279 = vmatprep.subr.mxu0 0.0
    %280 = vmatpush1.xpose.msra.mxu0 0.0
    %281 = vmatprep.subr.mxu0 0.0
    %282 = vmatpush1.xpose.msra.mxu0 0.0
    %283 = vmatprep.subr.mxu0 0.0
    %284 = vmatpush1.xpose.msra.mxu0 0.0
    %285 = vmatprep.subr.mxu0 0.0
    %286 = vmatpush1.xpose.msra.mxu0 0.0
    %287 = vmatprep.subr.mxu0 0.0
    %288 = vmatpush1.xpose.msra.mxu0 0.0
    %289 = vmatprep.subr.mxu0 0.0
    %290 = vmatpush1.xpose.msra.mxu0 0.0
    %291 = vmatprep.subr.mxu0 0.0
    %292 = vmatpush1.xpose.msra.mxu0 0.0
    %293 = vmatprep.subr.mxu0 0.0
    %294 = vmatpush1.xpose.msra.mxu0 0.0
    %295 = vmatprep.subr.mxu0 0.0
    %296 = vmatpush1.xpose.msra.mxu0 0.0
    %297 = vmatprep.subr.mxu0 0.0
    %298 = vmatpush1.xpose.msra.mxu0 0.0
    %299 = vmatprep.subr.mxu0 0.0
    %300 = vmatpush1.xpose.msra.mxu0 0.0
    %301 = vmatprep.subr.mxu0 0.0
    %302 = vmatpush1.xpose.msra.mxu0 0.0
    %303 = vmatprep.subr.mxu0 0.0
    %304 = vmatpush1.xpose.msra.mxu0 0.0
    %305 = vmatprep.subr.mxu0 0.0
    %306 = vmatpush1.xpose.msra.mxu0 0.0
    %307 = vmatprep.subr.mxu0 0.0
    %308 = vmatpush1.xpose.msra.mxu0 0.0
    %309 = vmatprep.subr.mxu0 0.0
    %310 = vmatpush1.xpose.msra.mxu0 0.0
    %311 = vmatprep.subr.mxu0 0.0
    %312 = vmatpush1.xpose.msra.mxu0 0.0
    %313 = vmatprep.subr.mxu0 0.0
    %314 = vmatpush1.xpose.msra.mxu0 0.0
    %315 = vmatprep.subr.mxu0 0.0
    %316 = vmatpush1.xpose.msra.mxu0 0.0
    %317 = vmatprep.mubr.f32.mxu0 0.0
    %318 = vmatmul.mubr.f32.gmra.mrb[0].mxu0 %v251
    %v319 = vpop.f32.mrb[0].mxu0
    %v320 = vadd.f32 0.0, %v319
    %v321 = vpop.f32.mrb[0].mxu0
    %322 = vdwg.mxu0
    %vm323 = vcmask 64512
    %v324 = vsel %vm323, %v247, -inf
    %325 = vmax.xlane.f32.xlu0 %v324
    %v326 = vpop.xlane.xlu0 %325
    %v327 = vsel %vm323, %v320, -inf
    %328 = vmax.xlane.f32.xlu0 %v327
    %v329 = vpop.xlane.xlu0 %328
    %v330 = vsub.f32 %v247, %v326
    %v331 = vsub.f32 %v320, %v329
    %v332 = vmul.f32 %v330, 1.442695
    %v333 = vpow.pop %v332
    %v334 = vmul.f32 %v331, 1.442695
    %v335 = vpow.pop %v334
    %v336 = vsel %vm323, %v333, 0.0
    %337 = vadd.xlane.f32.xlu0 %v336
    %v338 = vpop.xlane.xlu0 %337
    %v339 = vsel %vm323, %v335, 0.0
    %340 = vadd.xlane.f32.xlu0 %v339
    %v341 = vpop.xlane.xlu0 %340
    %v342 = vrcp.pop %v338
    %v343 = vmul.f32 %v333, %v342
    %v344 = vrcp.pop %v341
    %v345 = vmul.f32 %v335, %v344
    %v347 = vsel %vm323, %v343, 0
    %349 = vmatprep.subr.mxu0 0.0
    %350 = vmatpush1.msra.mxu0 %v82
    %351 = vmatprep.subr.mxu0 0.0
    %352 = vmatpush1.msra.mxu0 0.0
    %353 = vmatprep.subr.mxu0 0.0
    %354 = vmatpush1.msra.mxu0 0.0
    %355 = vmatprep.subr.mxu0 0.0
    %356 = vmatpush1.msra.mxu0 0.0
    %357 = vmatprep.subr.mxu0 0.0
    %358 = vmatpush1.msra.mxu0 0.0
    %359 = vmatprep.subr.mxu0 0.0
    %360 = vmatpush1.msra.mxu0 0.0
    %361 = vmatprep.subr.mxu0 0.0
    %362 = vmatpush1.msra.mxu0 0.0
    %363 = vmatprep.subr.mxu0 0.0
    %364 = vmatpush1.msra.mxu0 0.0
    %365 = vmatprep.subr.mxu0 0.0
    %366 = vmatpush1.msra.mxu0 0.0
    %367 = vmatprep.subr.mxu0 0.0
    %368 = vmatpush1.msra.mxu0 0.0
    %369 = vmatprep.subr.mxu0 0.0
    %370 = vmatpush1.msra.mxu0 0.0
    %371 = vmatprep.subr.mxu0 0.0
    %372 = vmatpush1.msra.mxu0 0.0
    %373 = vmatprep.subr.mxu0 0.0
    %374 = vmatpush1.msra.mxu0 0.0
    %375 = vmatprep.subr.mxu0 0.0
    %376 = vmatpush1.msra.mxu0 0.0
    %377 = vmatprep.subr.mxu0 0.0
    %378 = vmatpush1.msra.mxu0 0.0
    %379 = vmatprep.subr.mxu0 0.0
    %380 = vmatpush1.msra.mxu0 0.0
    %381 = vmatprep.subr.mxu0 0.0
    %382 = vmatpush1.msra.mxu0 0.0
    %383 = vmatprep.subr.mxu0 0.0
    %384 = vmatpush1.msra.mxu0 0.0
    %385 = vmatprep.subr.mxu0 0.0
    %386 = vmatpush1.msra.mxu0 0.0
    %387 = vmatprep.subr.mxu0 0.0
    %388 = vmatpush1.msra.mxu0 0.0
    %389 = vmatprep.subr.mxu0 0.0
    %390 = vmatpush1.msra.mxu0 0.0
    %391 = vmatprep.subr.mxu0 0.0
    %392 = vmatpush1.msra.mxu0 0.0
    %393 = vmatprep.subr.mxu0 0.0
    %394 = vmatpush1.msra.mxu0 0.0
    %395 = vmatprep.subr.mxu0 0.0
    %396 = vmatpush1.msra.mxu0 0.0
    %397 = vmatprep.subr.mxu0 0.0
    %398 = vmatpush1.msra.mxu0 0.0
    %399 = vmatprep.subr.mxu0 0.0
    %400 = vmatpush1.msra.mxu0 0.0
    %401 = vmatprep.subr.mxu0 0.0
    %402 = vmatpush1.msra.mxu0 0.0
    %403 = vmatprep.subr.mxu0 0.0
    %404 = vmatpush1.msra.mxu0 0.0
    %405 = vmatprep.subr.mxu0 0.0
    %406 = vmatpush1.msra.mxu0 0.0
    %407 = vmatprep.subr.mxu0 0.0
    %408 = vmatpush1.msra.mxu0 0.0
    %409 = vmatprep.subr.mxu0 0.0
    %410 = vmatpush1.msra.mxu0 0.0
    %411 = vmatprep.subr.mxu0 0.0
    %412 = vmatpush1.msra.mxu0 0.0
    %413 = vmatprep.mubr.f32.mxu0 0.0
    %414 = vmatmul.mubr.f32.gmra.mrb[0].mxu0 %v347
    %v415 = vpop.f32.mrb[0].mxu0
    %v416 = vadd.f32 0.0, %v415
    %v417 = vpop.f32.mrb[0].mxu0
    %418 = vdwg.mxu0
    %v420 = vsel %vm323, %v345, 0
    %422 = vmatprep.subr.mxu0 0.0
    %423 = vmatpush1.msra.mxu0 %v83
    %424 = vmatprep.subr.mxu0 0.0
    %425 = vmatpush1.msra.mxu0 0.0
    %426 = vmatprep.subr.mxu0 0.0
    %427 = vmatpush1.msra.mxu0 0.0
    %428 = vmatprep.subr.mxu0 0.0
    %429 = vmatpush1.msra.mxu0 0.0
    %430 = vmatprep.subr.mxu0 0.0
    %431 = vmatpush1.msra.mxu0 0.0
    %432 = vmatprep.subr.mxu0 0.0
    %433 = vmatpush1.msra.mxu0 0.0
    %434 = vmatprep.subr.mxu0 0.0
    %435 = vmatpush1.msra.mxu0 0.0
    %436 = vmatprep.subr.mxu0 0.0
    %437 = vmatpush1.msra.mxu0 0.0
    %438 = vmatprep.subr.mxu0 0.0
    %439 = vmatpush1.msra.mxu0 0.0
    %440 = vmatprep.subr.mxu0 0.0
    %441 = vmatpush1.msra.mxu0 0.0
    %442 = vmatprep.subr.mxu0 0.0
    %443 = vmatpush1.msra.mxu0 0.0
    %444 = vmatprep.subr.mxu0 0.0
    %445 = vmatpush1.msra.mxu0 0.0
    %446 = vmatprep.subr.mxu0 0.0
    %447 = vmatpush1.msra.mxu0 0.0
    %448 = vmatprep.subr.mxu0 0.0
    %449 = vmatpush1.msra.mxu0 0.0
    %450 = vmatprep.subr.mxu0 0.0
    %451 = vmatpush1.msra.mxu0 0.0
    %452 = vmatprep.subr.mxu0 0.0
    %453 = vmatpush1.msra.mxu0 0.0
    %454 = vmatprep.subr.mxu0 0.0
    %455 = vmatpush1.msra.mxu0 0.0
    %456 = vmatprep.subr.mxu0 0.0
    %457 = vmatpush1.msra.mxu0 0.0
    %458 = vmatprep.subr.mxu0 0.0
    %459 = vmatpush1.msra.mxu0 0.0
    %460 = vmatprep.subr.mxu0 0.0
    %461 = vmatpush1.msra.mxu0 0.0
    %462 = vmatprep.subr.mxu0 0.0
    %463 = vmatpush1.msra.mxu0 0.0
    %464 = vmatprep.subr.mxu0 0.0
    %465 = vmatpush1.msra.mxu0 0.0
    %466 = vmatprep.subr.mxu0 0.0
    %467 = vmatpush1.msra.mxu0 0.0
    %468 = vmatprep.subr.mxu0 0.0
    %469 = vmatpush1.msra.mxu0 0.0
    %470 = vmatprep.subr.mxu0 0.0
    %471 = vmatpush1.msra.mxu0 0.0
    %472 = vmatprep.subr.mxu0 0.0
    %473 = vmatpush1.msra.mxu0 0.0
    %474 = vmatprep.subr.mxu0 0.0
    %475 = vmatpush1.msra.mxu0 0.0
    %476 = vmatprep.subr.mxu0 0.0
    %477 = vmatpush1.msra.mxu0 0.0
    %478 = vmatprep.subr.mxu0 0.0
    %479 = vmatpush1.msra.mxu0 0.0
    %480 = vmatprep.subr.mxu0 0.0
    %481 = vmatpush1.msra.mxu0 0.0
    %482 = vmatprep.subr.mxu0 0.0
    %483 = vmatpush1.msra.mxu0 0.0
    %484 = vmatprep.subr.mxu0 0.0
    %485 = vmatpush1.msra.mxu0 0.0
    %486 = vmatprep.mubr.f32.mxu0 0.0
    %487 = vmatmul.mubr.f32.gmra.mrb[0].mxu0 %v420
    %v488 = vpop.f32.mrb[0].mxu0
    %v489 = vadd.f32 0.0, %v488
    %v490 = vpop.f32.mrb[0].mxu0
    %491 = vdwg.mxu0
    %v492 = vld [vmem:[%s1] sm:$0x3]
    %v493 = vld [vmem:[#allocation5] sm:$0xff]
    %v494 = vld [vmem:[#allocation5 + $0x8] sm:$0xff]
    %v495 = vld [vmem:[%s3] sm:$0x1]
    %v497 = vlaneseq
    %v498 = vshrl.u32 %v497, 7
    %v499 = vsub.s32 0, %v498
    %v500 = vrot.slane %v495, %v499
    %vm502 = vcmask 130048
    %v504 = vsel %vm502, %v492, 0
    %506 = vmatprep.subr.mxu0 0.0
    %507 = vmatpush1.msra.mxu0 %v493
    %508 = vmatprep.subr.mxu0 0.0
    %509 = vmatpush1.msra.mxu0 %v494
    %510 = vmatprep.subr.mxu0 0.0
    %511 = vmatpush1.msra.mxu0 0.0
    %512 = vmatprep.subr.mxu0 0.0
    %513 = vmatpush1.msra.mxu0 0.0
    %514 = vmatprep.subr.mxu0 0.0
    %515 = vmatpush1.msra.mxu0 0.0
    %516 = vmatprep.subr.mxu0 0.0
    %517 = vmatpush1.msra.mxu0 0.0
    %518 = vmatprep.subr.mxu0 0.0
    %519 = vmatpush1.msra.mxu0 0.0
    %520 = vmatprep.subr.mxu0 0.0
    %521 = vmatpush1.msra.mxu0 0.0
    %522 = vmatprep.subr.mxu0 0.0
    %523 = vmatpush1.msra.mxu0 0.0
    %524 = vmatprep.subr.mxu0 0.0
    %525 = vmatpush1.msra.mxu0 0.0
    %526 = vmatprep.subr.mxu0 0.0
    %527 = vmatpush1.msra.mxu0 0.0
    %528 = vmatprep.subr.mxu0 0.0
    %529 = vmatpush1.msra.mxu0 0.0
    %530 = vmatprep.subr.mxu0 0.0
    %531 = vmatpush1.msra.mxu0 0.0
    %532 = vmatprep.subr.mxu0 0.0
    %533 = vmatpush1.msra.mxu0 0.0
    %534 = vmatprep.subr.mxu0 0.0
    %535 = vmatpush1.msra.mxu0 0.0
    %536 = vmatprep.subr.mxu0 0.0
    %537 = vmatpush1.msra.mxu0 0.0
    %538 = vmatprep.subr.mxu0 0.0
    %539 = vmatpush1.msra.mxu0 0.0
    %540 = vmatprep.subr.mxu0 0.0
    %541 = vmatpush1.msra.mxu0 0.0
    %542 = vmatprep.subr.mxu0 0.0
    %543 = vmatpush1.msra.mxu0 0.0
    %544 = vmatprep.subr.mxu0 0.0
    %545 = vmatpush1.msra.mxu0 0.0
    %546 = vmatprep.subr.mxu0 0.0
    %547 = vmatpush1.msra.mxu0 0.0
    %548 = vmatprep.subr.mxu0 0.0
    %549 = vmatpush1.msra.mxu0 0.0
    %550 = vmatprep.subr.mxu0 0.0
    %551 = vmatpush1.msra.mxu0 0.0
    %552 = vmatprep.subr.mxu0 0.0
    %553 = vmatpush1.msra.mxu0 0.0
    %554 = vmatprep.subr.mxu0 0.0
    %555 = vmatpush1.msra.mxu0 0.0
    %556 = vmatprep.subr.mxu0 0.0
    %557 = vmatpush1.msra.mxu0 0.0
    %558 = vmatprep.subr.mxu0 0.0
    %559 = vmatpush1.msra.mxu0 0.0
    %560 = vmatprep.subr.mxu0 0.0
    %561 = vmatpush1.msra.mxu0 0.0
    %562 = vmatprep.subr.mxu0 0.0
    %563 = vmatpush1.msra.mxu0 0.0
    %564 = vmatprep.subr.mxu0 0.0
    %565 = vmatpush1.msra.mxu0 0.0
    %566 = vmatprep.subr.mxu0 0.0
    %567 = vmatpush1.msra.mxu0 0.0
    %568 = vmatprep.subr.mxu0 0.0
    %569 = vmatpush1.msra.mxu0 0.0
    %570 = vmatprep.mubr.f32.mxu0 0.0
    %571 = vmatmul.mubr.f32.gmra.mrb[0].mxu0 %v504
    %v572 = vpop.f32.mrb[0].mxu0
    %v573 = vadd.f32 %v500, %v572
    %v574 = vpop.f32.mrb[0].mxu0
    %575 = vdwg.mxu0
    %v576 = vld [vmem:[#allocation8] sm:$0xff]
    %v577 = vld [vmem:[#allocation8 + $0x8] sm:$0xff]
    %v578 = vld [vmem:[#allocation8 + $0x10] sm:$0xff]
    %v579 = vld [vmem:[#allocation8 + $0x18] sm:$0xff]
    %v581 = vsel %vm95, %v416, 0
    %v584 = vsel %vm95, %v489, 0
    %586 = vmatprep.subr.mxu0 0.0
    %587 = vmatpush1.msra.mxu0 %v576
    %588 = vmatprep.subr.mxu0 0.0
    %589 = vmatpush1.msra.mxu0 %v577
    %590 = vmatprep.subr.mxu0 0.0
    %591 = vmatpush1.msra.mxu0 %v578
    %592 = vmatprep.subr.mxu0 0.0
    %593 = vmatpush1.msra.mxu0 %v579
    %594 = vmatprep.subr.mxu0 0.0
    %595 = vmatpush1.msra.mxu0 0.0
    %596 = vmatprep.subr.mxu0 0.0
    %597 = vmatpush1.msra.mxu0 0.0
    %598 = vmatprep.subr.mxu0 0.0
    %599 = vmatpush1.msra.mxu0 0.0
    %600 = vmatprep.subr.mxu0 0.0
    %601 = vmatpush1.msra.mxu0 0.0
    %602 = vmatprep.subr.mxu0 0.0
    %603 = vmatpush1.msra.mxu0 0.0
    %604 = vmatprep.subr.mxu0 0.0
    %605 = vmatpush1.msra.mxu0 0.0
    %606 = vmatprep.subr.mxu0 0.0
    %607 = vmatpush1.msra.mxu0 0.0
    %608 = vmatprep.subr.mxu0 0.0
    %609 = vmatpush1.msra.mxu0 0.0
    %610 = vmatprep.subr.mxu0 0.0
    %611 = vmatpush1.msra.mxu0 0.0
    %612 = vmatprep.subr.mxu0 0.0
    %613 = vmatpush1.msra.mxu0 0.0
    %614 = vmatprep.subr.mxu0 0.0
    %615 = vmatpush1.msra.mxu0 0.0
    %616 = vmatprep.subr.mxu0 0.0
    %617 = vmatpush1.msra.mxu0 0.0
    %618 = vmatprep.subr.mxu0 0.0
    %619 = vmatpush1.msra.mxu0 0.0
    %620 = vmatprep.subr.mxu0 0.0
    %621 = vmatpush1.msra.mxu0 0.0
    %622 = vmatprep.subr.mxu0 0.0
    %623 = vmatpush1.msra.mxu0 0.0
    %624 = vmatprep.subr.mxu0 0.0
    %625 = vmatpush1.msra.mxu0 0.0
    %626 = vmatprep.subr.mxu0 0.0
    %627 = vmatpush1.msra.mxu0 0.0
    %628 = vmatprep.subr.mxu0 0.0
    %629 = vmatpush1.msra.mxu0 0.0
    %630 = vmatprep.subr.mxu0 0.0
    %631 = vmatpush1.msra.mxu0 0.0
    %632 = vmatprep.subr.mxu0 0.0
    %633 = vmatpush1.msra.mxu0 0.0
    %634 = vmatprep.subr.mxu0 0.0
    %635 = vmatpush1.msra.mxu0 0.0
    %636 = vmatprep.subr.mxu0 0.0
    %637 = vmatpush1.msra.mxu0 0.0
    %638 = vmatprep.subr.mxu0 0.0
    %639 = vmatpush1.msra.mxu0 0.0
    %640 = vmatprep.subr.mxu0 0.0
    %641 = vmatpush1.msra.mxu0 0.0
    %642 = vmatprep.subr.mxu0 0.0
    %643 = vmatpush1.msra.mxu0 0.0
    %644 = vmatprep.subr.mxu0 0.0
    %645 = vmatpush1.msra.mxu0 0.0
    %646 = vmatprep.subr.mxu0 0.0
    %647 = vmatpush1.msra.mxu0 0.0
    %648 = vmatprep.subr.mxu0 0.0
    %649 = vmatpush1.msra.mxu0 0.0
    %650 = vmatprep.mubr.f32.mxu0 0.0
    %651 = vmatmul.mubr.f32.gmra.mrb[0].mxu0 %v581
    %v652 = vpop.f32.mrb[0].mxu0
    %v653 = vadd.f32 0.0, %v652
    %v654 = vpop.f32.mrb[0].mxu0
    %655 = vmatprep.mubr.f32.mxu0 0.0
    %656 = vmatmul.mubr.f32.gmra.mrb[0].mxu0 %v584
    %v657 = vpop.f32.mrb[0].mxu0
    %v658 = vadd.f32 0.0, %v657
    %v659 = vpop.f32.mrb[0].mxu0
    %660 = vdwg.mxu0
    %v663 = vunpack.c.l.s4 1966171168
    %v664 = vunpack.c.0.s8 %v663
    %v665 = vlaneseq
    %v666 = vshrl.u32 %v665, 7
    %v667 = vsub.s32 %v664, %v666
    %v668 = vrot.slane %v573, %v667
    %v669 = vcombine.high %v668, %v668
    %v671 = vunpack.c.l.s4 1966171168
    %v672 = vunpack.c.0.s8 %v671
    %v673 = vlaneseq
    %v674 = vshrl.u32 %v673, 7
    %v675 = vsub.s32 %v672, %v674
    %v676 = vrot.slane %v668, %v675
    %v678 = vunpack.c.l.s4 1966171168
    %v679 = vunpack.c.0.s8 %v678
    %v680 = vlaneseq
    %v681 = vshrl.u32 %v680, 7
    %v682 = vsub.s32 %v679, %v681
    %v683 = vrot.slane %v669, %v682
    %v684 = vlaneseq
    %v685 = vshrl.u32 %v684, 7
    %v686 = vsub.s32 0, %v685
    %v687 = vrot.slane %v676, %v686
    %v688 = vlaneseq
    %v689 = vshrl.u32 %v688, 7
    %v690 = vsub.s32 0, %v689
    %v691 = vrot.slane %v683, %v690
    %v694 = vadd.f32 %v653, %v687
    %v695 = vadd.f32 %v658, %v691
    %v696 = vtanh.pop %v694
    %v697 = vtanh.pop %v695
    %v698 = vcombine.high %v696, 0.0
    %v700 = vunpack.c.l.s4 1983009808
    %v701 = vunpack.c.0.s8 %v700
    %v702 = vlaneseq
    %v703 = vshrl.u32 %v702, 7
    %v704 = vsub.s32 %v701, %v703
    %v705 = vrot.slane %v696, %v704
    %v707 = vunpack.c.l.s4 1983009808
    %v708 = vunpack.c.0.s8 %v707
    %v709 = vlaneseq
    %v710 = vshrl.u32 %v709, 7
    %v711 = vsub.s32 %v708, %v710
    %v712 = vrot.slane %v698, %v711
    %v713 = vcombine.high %v697, 0.0
    %v715 = vunpack.c.l.s4 1983009808
    %v716 = vunpack.c.0.s8 %v715
    %v717 = vlaneseq
    %v718 = vshrl.u32 %v717, 7
    %v719 = vsub.s32 %v716, %v718
    %v720 = vrot.slane %v697, %v719
    %v722 = vunpack.c.l.s4 1983009808
    %v723 = vunpack.c.0.s8 %v722
    %v724 = vlaneseq
    %v725 = vshrl.u32 %v724, 7
    %v726 = vsub.s32 %v723, %v725
    %v727 = vrot.slane %v713, %v726
    %v728 = vcombine.low %v705, %v720
    %v729 = vcombine.high %v705, %v720
    %v731 = vunpack.c.l.s4 1934713408
    %v732 = vunpack.c.0.s8 %v731
    %v733 = vlaneseq
    %v734 = vshrl.u32 %v733, 7
    %v735 = vsub.s32 %v732, %v734
    %v736 = vrot.slane %v728, %v735
    %v738 = vunpack.c.l.s4 1934713408
    %v739 = vunpack.c.0.s8 %v738
    %v740 = vlaneseq
    %v741 = vshrl.u32 %v740, 7
    %v742 = vsub.s32 %v739, %v741
    %v743 = vrot.slane %v729, %v742
    %v744 = vcombine.low %v712, %v727
    %v745 = vcombine.high %v712, %v727
    %v747 = vunpack.c.l.s4 1934713408
    %v748 = vunpack.c.0.s8 %v747
    %v749 = vlaneseq
    %v750 = vshrl.u32 %v749, 7
    %v751 = vsub.s32 %v748, %v750
    %v752 = vrot.slane %v744, %v751
    %v754 = vunpack.c.l.s4 1934713408
    %v755 = vunpack.c.0.s8 %v754
    %v756 = vlaneseq
    %v757 = vshrl.u32 %v756, 7
    %v758 = vsub.s32 %v755, %v757
    %v759 = vrot.slane %v745, %v758
    %v760 = vcombine.high %v736, 0.0
    %v761 = vcombine.high %v743, 0.0
    %v762 = vcombine.high %v752, 0.0
    %v763 = vcombine.high %v759, 0.0
    %765 = vrot.lane.b32.xlu0 %v760, 32
    %v766 = vpop.permute.xlu0 %765
    %769 = vrot.lane.b32.xlu0 %v743, 64
    %v770 = vpop.permute.xlu0 %769
    %773 = vrot.lane.b32.xlu0 %v761, 96
    %v774 = vpop.permute.xlu0 %773
    %777 = vrot.lane.b32.xlu0 %v762, 32
    %v778 = vpop.permute.xlu0 %777
    %781 = vrot.lane.b32.xlu0 %v759, 64
    %v782 = vpop.permute.xlu0 %781
    %785 = vrot.lane.b32.xlu0 %v763, 96
    %v786 = vpop.permute.xlu0 %785
    %v788 = vsel %vm95, %v736, %v766
    %vm789 = vcmask 523264
    %v790 = vsel %vm789, %v788, %v770
    %vm791 = vcmask 785408
    %v792 = vsel %vm791, %v790, %v774
    %v793 = vsel %vm95, %v752, %v778
    %v794 = vsel %vm789, %v793, %v782
    %v795 = vsel %vm791, %v794, %v786
    %v798 = vcombine.low %v792, %v795
    %v800 = vunpack.c.l.s4 1983009808
    %v801 = vunpack.c.0.s8 %v800
    %v802 = vlaneseq
    %v803 = vshrl.u32 %v802, 7
    %v804 = vsub.s32 %v801, %v803
    %v805 = vrot.slane %v798, %v804
    %807 = vst [vmem:[#allocation10] sm:$0xf] %v805
    // Predicated region
    $region46: #{tpu_custom_call.1} parent=1 // pred_check
      _
    $region47: #{tpu_custom_call.1} parent=1 // pred_check_branch
      %809 = sbr.rel (0) target = $region49
    $region48: #{tpu_custom_call.1} parent=1 // pred_region
      %s811 = ssub.s32 64, 64
      %812 = vsyncadd [#allocation4], %s811
      %s814 = sshll.u32 [#allocation10], 4
      %s815 = int_to_ptr.vmem [resolvable:$true] %s814
      %817 = dma.vmem_to_hbm [thread:$0]  %s815, 64, %s7, [#allocation4]
    $region49: #{tpu_custom_call.1} parent=1 // pred_fallthru
      _
    // Predicated region
    $region50: #{tpu_custom_call.1} parent=1 // pred_check
      _
    $region51: #{tpu_custom_call.1} parent=1 // pred_check_branch
      %819 = sbr.rel (0) target = $region53
    $region52: #{tpu_custom_call.1} parent=1 // pred_region
      %820 = dma.done [#allocation4], 64
    $region53: #{tpu_custom_call.1} parent=1 // pred_fallthru
      _
    %821 = vsyncpa [#allocation3], 1
    %822 = vsyncpa [#allocation6], 1
    %823 = vsyncpa [#allocation9], 1
    %824 = vsyncpa [#allocation4], 1

</llo_original>
